<compile_context>
chip_gen: v7x
topology: tpu7x:2x2x1
jax: 0.10.0
libtpu: 0.0.40
codegen_flags: <defaults>
</compile_context>

<pallas_src>
import jax
import jax.numpy as jnp
from jax.experimental import pallas as pl
from jax.experimental.pallas import tpu as pltpu


# ----------------------------------------------------------------------------
# Fused kernel: attention + context + (all-T) decoder heads -> bmi_h (B, T)
# ----------------------------------------------------------------------------
def decoder2_fused_kernel(enc_ref, hn_ref, demo_ref, feat_ref,
                          wa_ref, ba_ref, v_ref,
                          w1h_ref, w1w_ref, w1d_ref, w1f_ref, b1_ref,
                          w23_ref, b23_ref, out_ref):
    enc = enc_ref[...]                                            # (Bb, S, R) f32
    bb, s, r = enc.shape

    # ---- LSTMAttention: energy = tanh(enc @ Wa + ba)  (MXU, 2D matmul) ----
    energy = jnp.tanh(
        jnp.dot(enc.reshape(bb * s, r), wa_ref[...],
                preferred_element_type=jnp.float32) + ba_ref[...]
    ).reshape(bb, s, -1)                                          # (Bb, S, H)

    # scores = energy @ v^T ; softmax over the sequence axis (torch dim=1).
    # (Bb, S, 1) layout: one sublane-reduce chain; fine for block_b <= ~64.
    scores = jnp.sum(energy * v_ref[...], axis=-1, keepdims=True)  # (Bb, S, 1)
    m = jnp.max(scores, axis=1, keepdims=True)
    e = jnp.exp(scores - m)
    a = e / jnp.sum(e, axis=1, keepdims=True)                      # (Bb, S, 1)

    # weighted = bmm(a.unsqueeze(1), enc).squeeze()
    weighted = jnp.sum(a * enc, axis=1)                            # (Bb, R)

    # ---- first Linear for all T heads at once; reg_input concat replaced by
    #      accumulated partial matmuls over W1's row blocks ----
    h1 = (jnp.dot(hn_ref[...], w1h_ref[...], preferred_element_type=jnp.float32)
          + jnp.dot(weighted, w1w_ref[...], preferred_element_type=jnp.float32)
          + jnp.dot(demo_ref[...], w1d_ref[...], preferred_element_type=jnp.float32)
          + jnp.dot(feat_ref[...], w1f_ref[...], preferred_element_type=jnp.float32)
          + b1_ref[...])                                           # (Bb, T*H1)
    h1 = jnp.where(h1 >= 0.0, h1, 0.1 * h1)                        # LeakyReLU(0.1)

    # ---- folded Linear2∘Linear3 for all t via a block-diagonal (T*H1, T) matmul ----
    out_ref[...] = (jnp.dot(h1, w23_ref[...], preferred_element_type=jnp.float32)
                    + b23_ref[...])                                # (Bb, T)  = bmi_h


def fused_decoder2_call(enc, h_n, enc_demo, feat_flat,
                        wa, ba, v, w1_hn, w1_wt, w1_dm, w1_ft, b1, w23, b23,
                        *, block_b=None):
    """Returns bmi_h of shape (B, T)."""
    B, S, R = enc.shape
    H = wa.shape[1]
    Dd = enc_demo.shape[1]
    Df = feat_flat.shape[1]
    TH1 = b1.shape[1]
    T = w23.shape[1]

    # Full batch in one grid step unless B is large; then tile (block_b % 8 == 0).
    if block_b is None or block_b >= B:
        block_b = B
    nb = pl.cdiv(B, block_b)

    def full2d(shape):
        return pl.BlockSpec(shape, lambda i: (0, 0))

    return pl.pallas_call(
        decoder2_fused_kernel,
        out_shape=jax.ShapeDtypeStruct((B, T), jnp.float32),
        grid_spec=pltpu.PrefetchScalarGridSpec(
            num_scalar_prefetch=0,
            grid=(nb,),
            in_specs=[
                pl.BlockSpec((block_b, S, R), lambda i: (i, 0, 0)),   # encoder_outputs
                pl.BlockSpec((block_b, R), lambda i: (i, 0)),         # h_n
                pl.BlockSpec((block_b, Dd), lambda i: (i, 0)),        # enc_demo
                pl.BlockSpec((block_b, Df), lambda i: (i, 0)),        # featEmbed flattened
                full2d((R, H)),                                       # attention Wa
                full2d((1, H)),                                       # attention ba
                full2d((1, H)),                                       # attention v
                full2d((R, TH1)),                                     # W1 rows for h_n
                full2d((R, TH1)),                                     # W1 rows for weighted
                full2d((Dd, TH1)),                                    # W1 rows for enc_demo
                full2d((Df, TH1)),                                    # W1 rows for featEmbed
                full2d((1, TH1)),                                     # b1 (all t)
                full2d((TH1, T)),                                     # folded W2@W3 block-diag
                full2d((1, T)),                                       # folded bias
            ],
            out_specs=pl.BlockSpec((block_b, T), lambda i: (i, 0)),
        ),
        compiler_params=pltpu.CompilerParams(
            dimension_semantics=("parallel",),     # batch rows independent (megacore on v7x)
        ),
    )(enc, h_n, enc_demo, feat_flat, wa, ba, v,
      w1_hn, w1_wt, w1_dm, w1_ft, b1, w23, b23)


# ----------------------------------------------------------------------------
# Decoder2.forward equivalent (find_contri=False path).
# ----------------------------------------------------------------------------
def decoder2_forward(params, featEmbed, encoder_outputs, h_n, enc_demo):
    wa, ba, v = params["wa"], params["ba"], params["v"]
    w1, b1 = params["w1"], params["b1"]          # (T, D, H1), (T, 1, H1)
    w2, b2 = params["w2"], params["b2"]          # (T, H1, H2), (T, 1, H2)
    w3, b3 = params["w3"], params["b3"]          # (T, 1, H2),  (T, 1, 1)
    T, D, H1 = w1.shape
    B, S, R = encoder_outputs.shape
    Dd = enc_demo.shape[1]

    # Fold the first Linear across t: columns [t*H1:(t+1)*H1] of (D, T*H1) are W1[t].
    w1_full = jnp.transpose(w1, (1, 0, 2)).reshape(D, T * H1)
    b1_full = jnp.transpose(b1, (1, 0, 2)).reshape(1, T * H1)
    # Split W1's rows into the reg_input concat segments (kernel accumulates partial matmuls).
    w1_hn = w1_full[:R]
    w1_wt = w1_full[R:2 * R]
    w1_dm = w1_full[2 * R:2 * R + Dd]
    w1_ft = w1_full[2 * R + Dd:]

    # Fold Linear2 ∘ Linear3 (no nonlinearity between them): z_t = h1_t @ (W2[t] @ W3[t]^T) + b23_t
    w23_cols = jnp.einsum("thk,tk->th", w2, w3[:, 0, :])            # (T, H1)
    eye = jnp.eye(T, dtype=w2.dtype)
    w23 = (w23_cols[:, :, None] * eye[:, None, :]).reshape(T * H1, T)   # block-diagonal
    b23 = (jnp.sum(b2[:, 0, :] * w3[:, 0, :], axis=-1) + b3[:, 0, 0]).reshape(1, T)

    # featEmbed[:,0..3] concat == row-major flatten of (B, 4, E).
    feat_flat = featEmbed.reshape(B, -1)

    # The torch loop recomputes self.attn(encoder_outputs) every step with identical
    # inputs/weights; the result is t-invariant, so all T steps share one fused kernel call.
    bmi_h_bt = fused_decoder2_call(encoder_outputs, h_n, enc_demo, feat_flat,
                                   wa, ba, v, w1_hn, w1_wt, w1_dm, w1_ft,
                                   b1_full, w23, b23)               # (B, T)

    # sigmoid / [1-p, p] / argmax kept in the wrapper (tiny; keeps kernel to one output stream).
    bmi_h = jnp.transpose(bmi_h_bt)[:, :, None]                     # (T, B, 1)
    p = jax.nn.sigmoid(bmi_h)
    bmi_prob = jnp.concatenate([1.0 - p, p], axis=-1)               # (T, B, 2)
    # argmax([1-p, p]) == 1 iff p > 0.5 (first-occurrence tie break -> 0), matches torch.
    bmi_label = (p > 0.5).astype(jnp.int32)                         # (T, B, 1)

    dec_output = [bmi_label[t, :, 0] for t in range(T)]             # list of (B,) labels
    dec_prob = [bmi_prob[t] for t in range(T)]                      # list of (B, 2) probs
    disc_input = bmi_h.reshape(T * B, 1)                            # extend() over bmi_h rows
    kl_input = bmi_label.reshape(T * B)                             # dict {0:0,1:1} is identity
    return dec_output, dec_prob, disc_input, kl_input


# ----------------------------------------------------------------------------
# Pure-JAX reference (mirrors the torch op order exactly) for correctness check.
# ----------------------------------------------------------------------------
def reference_forward(params, featEmbed, encoder_outputs, h_n, enc_demo):
    T = params["w1"].shape[0]
    energy = jnp.tanh(jnp.einsum("bsr,rh->bsh", encoder_outputs, params["wa"]) + params["ba"][0])
    scores = jnp.einsum("bsh,h->bs", energy, params["v"][0])
    a = jax.nn.softmax(scores, axis=1)
    weighted = jnp.einsum("bs,bsr->br", a, encoder_outputs)
    reg = jnp.concatenate(
        [h_n, weighted, enc_demo,
         featEmbed[:, 0, :], featEmbed[:, 1, :], featEmbed[:, 2, :], featEmbed[:, 3, :]],
        axis=1)
    hs, probs, labels = [], [], []
    for t in range(T):
        h = reg @ params["w1"][t] + params["b1"][t, 0]
        h = jnp.where(h >= 0.0, h, 0.1 * h)
        h = h @ params["w2"][t] + params["b2"][t, 0]
        z = jnp.sum(h * params["w3"][t], axis=-1, keepdims=True) + params["b3"][t, 0]
        p = 1.0 / (1.0 + jnp.exp(-z))
        prob = jnp.concatenate([1.0 - p, p], axis=-1)
        hs.append(z)
        probs.append(prob)
        labels.append(jnp.argmax(prob, axis=1).astype(jnp.int32))
    return jnp.stack(hs), jnp.stack(probs), jnp.stack(labels)


if __name__ == "__main__":
    # Small shapes consistent with the module:
    #   batch=8, seq=8, rnn_size=32, embed_size=8, latent_size=16, time=3
    B, S, R, E, L, T = 8, 8, 32, 8, 16, 3
    H = R // 2                      # LSTMAttention hidden
    D_demo = 5 * (E // 2)           # enc_demo width (5 * embed_size/2)
    D = 2 * R + D_demo + 4 * E      # Linear input width from the module definition
    H1, H2 = 2 * L, L

    key = jax.random.PRNGKey(0)
    ks = jax.random.split(key, 12)
    sc = 0.1

    encoder_outputs = jax.random.normal(ks[0], (B, S, R), jnp.float32)
    h_n = jax.random.normal(ks[1], (B, R), jnp.float32)
    enc_demo = jax.random.normal(ks[2], (B, D_demo), jnp.float32)
    featEmbed = jax.random.normal(ks[3], (B, 4, E), jnp.float32)

    params = {
        # LSTMAttention
        "wa": sc * jax.random.normal(ks[4], (R, H), jnp.float32),
        "ba": sc * jax.random.normal(ks[5], (1, H), jnp.float32),
        "v":  sc * jax.random.normal(ks[6], (1, H), jnp.float32),
        # per-time-step heads (stacked over T)
        "w1": sc * jax.random.normal(ks[7], (T, D, H1), jnp.float32),
        "b1": sc * jax.random.normal(ks[8], (T, 1, H1), jnp.float32),
        "w2": sc * jax.random.normal(ks[9], (T, H1, H2), jnp.float32),
        "b2": sc * jax.random.normal(ks[10], (T, 1, H2), jnp.float32),
        "w3": sc * jax.random.normal(ks[11], (T, 1, H2), jnp.float32),
        "b3": sc * jnp.ones((T, 1, 1), jnp.float32),
    }

    dec_output, dec_prob, disc_input, kl_input = decoder2_forward(
        params, featEmbed, encoder_outputs, h_n, enc_demo)
    jax.block_until_ready((dec_output, dec_prob, disc_input, kl_input))

    ref_h, ref_prob, ref_label = reference_forward(
        params, featEmbed, encoder_outputs, h_n, enc_demo)

    assert jnp.allclose(jnp.stack(dec_prob), ref_prob, rtol=1e-4, atol=1e-4), "prob mismatch"
    assert jnp.allclose(disc_input.reshape(T, B, 1), ref_h, rtol=1e-4, atol=1e-4), "bmi_h mismatch"
    assert jnp.array_equal(jnp.stack(dec_output), ref_label), "label mismatch"
    assert jnp.array_equal(kl_input, ref_label.reshape(-1)), "kl_input mismatch"

    print("KERNEL_OK")
</pallas_src>

<mosaic_0001>
module attributes {stable_mosaic.version = 11 : i64} {
  func.func @decoder2_fused_kernel(%arg0: i32, %arg1: memref<8x8x32xf32, #tpu.memory_space<vmem>>, %arg2: memref<8x32xf32, #tpu.memory_space<vmem>>, %arg3: memref<8x20xf32, #tpu.memory_space<vmem>>, %arg4: memref<8x32xf32, #tpu.memory_space<vmem>>, %arg5: memref<32x16xf32, #tpu.memory_space<vmem>>, %arg6: memref<1x16xf32, #tpu.memory_space<vmem>>, %arg7: memref<1x16xf32, #tpu.memory_space<vmem>>, %arg8: memref<32x96xf32, #tpu.memory_space<vmem>>, %arg9: memref<32x96xf32, #tpu.memory_space<vmem>>, %arg10: memref<20x96xf32, #tpu.memory_space<vmem>>, %arg11: memref<32x96xf32, #tpu.memory_space<vmem>>, %arg12: memref<1x96xf32, #tpu.memory_space<vmem>>, %arg13: memref<96x3xf32, #tpu.memory_space<vmem>>, %arg14: memref<1x3xf32, #tpu.memory_space<vmem>>, %arg15: memref<8x3xf32, #tpu.memory_space<vmem>>) attributes {dimension_semantics = [#tpu.dimension_semantics<parallel>], iteration_bounds = array<i64: 1>, scalar_prefetch = 0 : i64, scratch_operands = 0 : i64, tpu.core_type = #tpu.core_type<tc>, window_params = [{transform_indices = @transform_0, window_bounds = array<i64: 8, 8, 32>}, {transform_indices = @transform_1, window_bounds = array<i64: 8, 32>}, {transform_indices = @transform_2, window_bounds = array<i64: 8, 20>}, {transform_indices = @transform_3, window_bounds = array<i64: 8, 32>}, {pipeline_mode = #tpu.pipeline_mode<synchronous>, transform_indices = @transform_4, window_bounds = array<i64: 32, 16>}, {pipeline_mode = #tpu.pipeline_mode<synchronous>, transform_indices = @transform_5, window_bounds = array<i64: 1, 16>}, {pipeline_mode = #tpu.pipeline_mode<synchronous>, transform_indices = @transform_6, window_bounds = array<i64: 1, 16>}, {pipeline_mode = #tpu.pipeline_mode<synchronous>, transform_indices = @transform_7, window_bounds = array<i64: 32, 96>}, {pipeline_mode = #tpu.pipeline_mode<synchronous>, transform_indices = @transform_8, window_bounds = array<i64: 32, 96>}, {pipeline_mode = #tpu.pipeline_mode<synchronous>, transform_indices = @transform_9, window_bounds = array<i64: 20, 96>}, {pipeline_mode = #tpu.pipeline_mode<synchronous>, transform_indices = @transform_10, window_bounds = array<i64: 32, 96>}, {pipeline_mode = #tpu.pipeline_mode<synchronous>, transform_indices = @transform_11, window_bounds = array<i64: 1, 96>}, {pipeline_mode = #tpu.pipeline_mode<synchronous>, transform_indices = @transform_12, window_bounds = array<i64: 96, 3>}, {pipeline_mode = #tpu.pipeline_mode<synchronous>, transform_indices = @transform_13, window_bounds = array<i64: 1, 3>}, {transform_indices = @transform_14, window_bounds = array<i64: 8, 3>}]} {
    %c0 = arith.constant 0 : index
    %c0_0 = arith.constant 0 : index
    %c0_1 = arith.constant 0 : index
    %0 = vector.load %arg1[%c0, %c0_0, %c0_1] : memref<8x8x32xf32, #tpu.memory_space<vmem>>, vector<8x8x32xf32>
    %1 = vector.shape_cast %0 : vector<8x8x32xf32> to vector<64x32xf32>
    %c0_2 = arith.constant 0 : index
    %c0_3 = arith.constant 0 : index
    %2 = vector.load %arg5[%c0_2, %c0_3] : memref<32x16xf32, #tpu.memory_space<vmem>>, vector<32x16xf32>
    %cst = arith.constant dense<0.000000e+00> : vector<64x16xf32>
    %3 = tpu.matmul %1, %2, %cst {dimension_numbers = #tpu.dot_dimension_numbers<[1], [0], [0], [1], [0, 0, 1, 1], [], []>} : vector<64x32xf32>, vector<32x16xf32>, vector<64x16xf32> -> vector<64x16xf32>
    %c0_4 = arith.constant 0 : index
    %c0_5 = arith.constant 0 : index
    %4 = vector.load %arg6[%c0_4, %c0_5] : memref<1x16xf32, #tpu.memory_space<vmem>>, vector<1x16xf32>
    %5 = vector.broadcast %4 : vector<1x16xf32> to vector<64x16xf32>
    %6 = arith.addf %3, %5 : vector<64x16xf32>
    %7 = math.tanh %6 : vector<64x16xf32>
    %8 = vector.shape_cast %7 : vector<64x16xf32> to vector<8x8x16xf32>
    %c0_6 = arith.constant 0 : index
    %c0_7 = arith.constant 0 : index
    %9 = vector.load %arg7[%c0_6, %c0_7] : memref<1x16xf32, #tpu.memory_space<vmem>>, vector<1x16xf32>
    %10 = vector.shape_cast %9 : vector<1x16xf32> to vector<1x1x16xf32>
    %11 = vector.broadcast %10 : vector<1x1x16xf32> to vector<8x8x16xf32>
    %12 = arith.mulf %8, %11 : vector<8x8x16xf32>
    %cst_8 = arith.constant dense<0.000000e+00> : vector<8x8xf32>
    %13 = vector.multi_reduction <add>, %12, %cst_8 [2] : vector<8x8x16xf32> to vector<8x8xf32>
    %14 = vector.shape_cast %13 : vector<8x8xf32> to vector<8x8x1xf32>
    %cst_9 = arith.constant dense<0xFF800000> : vector<8x1xf32>
    %15 = vector.multi_reduction <maximumf>, %14, %cst_9 [1] : vector<8x8x1xf32> to vector<8x1xf32>
    %16 = vector.shape_cast %15 : vector<8x1xf32> to vector<8x1x1xf32>
    %17 = vector.broadcast %16 : vector<8x1x1xf32> to vector<8x8x1xf32>
    %18 = arith.subf %14, %17 : vector<8x8x1xf32>
    %19 = math.exp %18 : vector<8x8x1xf32>
    %cst_10 = arith.constant dense<0.000000e+00> : vector<8x1xf32>
    %20 = vector.multi_reduction <add>, %19, %cst_10 [1] : vector<8x8x1xf32> to vector<8x1xf32>
    %21 = vector.shape_cast %20 : vector<8x1xf32> to vector<8x1x1xf32>
    %22 = vector.broadcast %21 : vector<8x1x1xf32> to vector<8x8x1xf32>
    %23 = arith.divf %19, %22 : vector<8x8x1xf32>
    %24 = vector.broadcast %23 : vector<8x8x1xf32> to vector<8x8x32xf32>
    %25 = arith.mulf %24, %0 : vector<8x8x32xf32>
    %cst_11 = arith.constant dense<0.000000e+00> : vector<8x32xf32>
    %26 = vector.multi_reduction <add>, %25, %cst_11 [1] : vector<8x8x32xf32> to vector<8x32xf32>
    %c0_12 = arith.constant 0 : index
    %c0_13 = arith.constant 0 : index
    %27 = vector.load %arg2[%c0_12, %c0_13] : memref<8x32xf32, #tpu.memory_space<vmem>>, vector<8x32xf32>
    %c0_14 = arith.constant 0 : index
    %c0_15 = arith.constant 0 : index
    %28 = vector.load %arg8[%c0_14, %c0_15] : memref<32x96xf32, #tpu.memory_space<vmem>>, vector<32x96xf32>
    %cst_16 = arith.constant dense<0.000000e+00> : vector<8x96xf32>
    %29 = tpu.matmul %27, %28, %cst_16 {dimension_numbers = #tpu.dot_dimension_numbers<[1], [0], [0], [1], [0, 0, 1, 1], [], []>} : vector<8x32xf32>, vector<32x96xf32>, vector<8x96xf32> -> vector<8x96xf32>
    %c0_17 = arith.constant 0 : index
    %c0_18 = arith.constant 0 : index
    %30 = vector.load %arg9[%c0_17, %c0_18] : memref<32x96xf32, #tpu.memory_space<vmem>>, vector<32x96xf32>
    %cst_19 = arith.constant dense<0.000000e+00> : vector<8x96xf32>
    %31 = tpu.matmul %26, %30, %cst_19 {dimension_numbers = #tpu.dot_dimension_numbers<[1], [0], [0], [1], [0, 0, 1, 1], [], []>} : vector<8x32xf32>, vector<32x96xf32>, vector<8x96xf32> -> vector<8x96xf32>
    %32 = arith.addf %29, %31 : vector<8x96xf32>
    %c0_20 = arith.constant 0 : index
    %c0_21 = arith.constant 0 : index
    %33 = vector.load %arg3[%c0_20, %c0_21] : memref<8x20xf32, #tpu.memory_space<vmem>>, vector<8x20xf32>
    %c0_22 = arith.constant 0 : index
    %c0_23 = arith.constant 0 : index
    %34 = vector.load %arg10[%c0_22, %c0_23] : memref<20x96xf32, #tpu.memory_space<vmem>>, vector<20x96xf32>
    %cst_24 = arith.constant dense<0.000000e+00> : vector<8x96xf32>
    %35 = tpu.matmul %33, %34, %cst_24 {dimension_numbers = #tpu.dot_dimension_numbers<[1], [0], [0], [1], [0, 0, 1, 1], [], []>} : vector<8x20xf32>, vector<20x96xf32>, vector<8x96xf32> -> vector<8x96xf32>
    %36 = arith.addf %32, %35 : vector<8x96xf32>
    %c0_25 = arith.constant 0 : index
    %c0_26 = arith.constant 0 : index
    %37 = vector.load %arg4[%c0_25, %c0_26] : memref<8x32xf32, #tpu.memory_space<vmem>>, vector<8x32xf32>
    %c0_27 = arith.constant 0 : index
    %c0_28 = arith.constant 0 : index
    %38 = vector.load %arg11[%c0_27, %c0_28] : memref<32x96xf32, #tpu.memory_space<vmem>>, vector<32x96xf32>
    %cst_29 = arith.constant dense<0.000000e+00> : vector<8x96xf32>
    %39 = tpu.matmul %37, %38, %cst_29 {dimension_numbers = #tpu.dot_dimension_numbers<[1], [0], [0], [1], [0, 0, 1, 1], [], []>} : vector<8x32xf32>, vector<32x96xf32>, vector<8x96xf32> -> vector<8x96xf32>
    %40 = arith.addf %36, %39 : vector<8x96xf32>
    %c0_30 = arith.constant 0 : index
    %c0_31 = arith.constant 0 : index
    %41 = vector.load %arg12[%c0_30, %c0_31] : memref<1x96xf32, #tpu.memory_space<vmem>>, vector<1x96xf32>
    %42 = vector.broadcast %41 : vector<1x96xf32> to vector<8x96xf32>
    %43 = arith.addf %40, %42 : vector<8x96xf32>
    %cst_32 = arith.constant 0.000000e+00 : f32
    %44 = vector.broadcast %cst_32 : f32 to vector<8x96xf32>
    %45 = arith.cmpf oge, %43, %44 : vector<8x96xf32>
    %cst_33 = arith.constant 1.000000e-01 : f32
    %46 = vector.broadcast %cst_33 : f32 to vector<8x96xf32>
    %47 = arith.mulf %46, %43 : vector<8x96xf32>
    %48 = arith.select %45, %43, %47 : vector<8x96xi1>, vector<8x96xf32>
    %c0_34 = arith.constant 0 : index
    %c0_35 = arith.constant 0 : index
    %49 = vector.load %arg13[%c0_34, %c0_35] : memref<96x3xf32, #tpu.memory_space<vmem>>, vector<96x3xf32>
    %cst_36 = arith.constant dense<0.000000e+00> : vector<8x3xf32>
    %50 = tpu.matmul %48, %49, %cst_36 {dimension_numbers = #tpu.dot_dimension_numbers<[1], [0], [0], [1], [0, 0, 1, 1], [], []>} : vector<8x96xf32>, vector<96x3xf32>, vector<8x3xf32> -> vector<8x3xf32>
    %c0_37 = arith.constant 0 : index
    %c0_38 = arith.constant 0 : index
    %51 = vector.load %arg14[%c0_37, %c0_38] : memref<1x3xf32, #tpu.memory_space<vmem>>, vector<1x3xf32>
    %52 = vector.broadcast %51 : vector<1x3xf32> to vector<8x3xf32>
    %53 = arith.addf %50, %52 : vector<8x3xf32>
    %c0_39 = arith.constant 0 : index
    %c0_40 = arith.constant 0 : index
    %54 = vector.load %arg15[%c0_39, %c0_40] : memref<8x3xf32, #tpu.memory_space<vmem>>, vector<8x3xf32>
    tpu.vector_store %arg15[%c0_39, %c0_40], %53 {strides = array<i32>} : memref<8x3xf32, #tpu.memory_space<vmem>>, vector<8x3xf32>,
    return
  }
  func.func @transform_0(%arg0: i32) -> (i32, i32, i32) {
    %c0_i32 = arith.constant 0 : i32
    %c0_i32_0 = arith.constant 0 : i32
    %c0_i32_1 = arith.constant 0 : i32
    return %arg0, %c0_i32, %c0_i32_0 : i32, i32, i32
  }
  func.func @transform_1(%arg0: i32) -> (i32, i32) {
    %c0_i32 = arith.constant 0 : i32
    %c0_i32_0 = arith.constant 0 : i32
    return %arg0, %c0_i32 : i32, i32
  }
  func.func @transform_2(%arg0: i32) -> (i32, i32) {
    %c0_i32 = arith.constant 0 : i32
    %c0_i32_0 = arith.constant 0 : i32
    return %arg0, %c0_i32 : i32, i32
  }
  func.func @transform_3(%arg0: i32) -> (i32, i32) {
    %c0_i32 = arith.constant 0 : i32
    %c0_i32_0 = arith.constant 0 : i32
    return %arg0, %c0_i32 : i32, i32
  }
  func.func @transform_4(%arg0: i32) -> (i32, i32) {
    %c0_i32 = arith.constant 0 : i32
    %c0_i32_0 = arith.constant 0 : i32
    %c0_i32_1 = arith.constant 0 : i32
    return %c0_i32, %c0_i32_0 : i32, i32
  }
  func.func @transform_5(%arg0: i32) -> (i32, i32) {
    %c0_i32 = arith.constant 0 : i32
    %c0_i32_0 = arith.constant 0 : i32
    %c0_i32_1 = arith.constant 0 : i32
    return %c0_i32, %c0_i32_0 : i32, i32
  }
  func.func @transform_6(%arg0: i32) -> (i32, i32) {
    %c0_i32 = arith.constant 0 : i32
    %c0_i32_0 = arith.constant 0 : i32
    %c0_i32_1 = arith.constant 0 : i32
    return %c0_i32, %c0_i32_0 : i32, i32
  }
  func.func @transform_7(%arg0: i32) -> (i32, i32) {
    %c0_i32 = arith.constant 0 : i32
    %c0_i32_0 = arith.constant 0 : i32
    %c0_i32_1 = arith.constant 0 : i32
    return %c0_i32, %c0_i32_0 : i32, i32
  }
  func.func @transform_8(%arg0: i32) -> (i32, i32) {
    %c0_i32 = arith.constant 0 : i32
    %c0_i32_0 = arith.constant 0 : i32
    %c0_i32_1 = arith.constant 0 : i32
    return %c0_i32, %c0_i32_0 : i32, i32
  }
  func.func @transform_9(%arg0: i32) -> (i32, i32) {
    %c0_i32 = arith.constant 0 : i32
    %c0_i32_0 = arith.constant 0 : i32
    %c0_i32_1 = arith.constant 0 : i32
    return %c0_i32, %c0_i32_0 : i32, i32
  }
  func.func @transform_10(%arg0: i32) -> (i32, i32) {
    %c0_i32 = arith.constant 0 : i32
    %c0_i32_0 = arith.constant 0 : i32
    %c0_i32_1 = arith.constant 0 : i32
    return %c0_i32, %c0_i32_0 : i32, i32
  }
  func.func @transform_11(%arg0: i32) -> (i32, i32) {
    %c0_i32 = arith.constant 0 : i32
    %c0_i32_0 = arith.constant 0 : i32
    %c0_i32_1 = arith.constant 0 : i32
    return %c0_i32, %c0_i32_0 : i32, i32
  }
  func.func @transform_12(%arg0: i32) -> (i32, i32) {
    %c0_i32 = arith.constant 0 : i32
    %c0_i32_0 = arith.constant 0 : i32
    %c0_i32_1 = arith.constant 0 : i32
    return %c0_i32, %c0_i32_0 : i32, i32
  }
  func.func @transform_13(%arg0: i32) -> (i32, i32) {
    %c0_i32 = arith.constant 0 : i32
    %c0_i32_0 = arith.constant 0 : i32
    %c0_i32_1 = arith.constant 0 : i32
    return %c0_i32, %c0_i32_0 : i32, i32
  }
  func.func @transform_14(%arg0: i32) -> (i32, i32) {
    %c0_i32 = arith.constant 0 : i32
    %c0_i32_0 = arith.constant 0 : i32
    return %arg0, %c0_i32 : i32, i32
  }
}

</mosaic_0001>

<llo_original>
// kernel: tpu_custom_call.1
$region0: #{tpu_custom_call.1}
  #allocation0 [shape = 'u32[]', space=smem, size = 0x4, offset = 0x4, fixed_abs, tag = 'smem constant byte address 0x4 - core index']
  #allocation1 [shape = 'u32[144,128]{1,0:T(1,128)}', space=vmem, size = 0x12000, scoped, tag = 'internal scratch']
  %s0 = inlined_call_operand.vmem [shape: f32[8,8,32], index: 0, kind: input, shape index: {}]
  %s1 = inlined_call_operand.hbm [shape: f32[8,32], index: 1, kind: input, shape index: {}]
  %s2 = inlined_call_operand.hbm [shape: f32[8,20], index: 2, kind: input, shape index: {}]
  %s3 = inlined_call_operand.hbm [shape: f32[8,32], index: 3, kind: input, shape index: {}]
  %s4 = inlined_call_operand.vmem [shape: f32[32,16], index: 4, kind: input, shape index: {}]
  %s5 = inlined_call_operand.vmem [shape: f32[1,16], index: 5, kind: input, shape index: {}]
  %s6 = inlined_call_operand.vmem [shape: f32[1,16], index: 6, kind: input, shape index: {}]
  %s7 = inlined_call_operand.vmem [shape: f32[32,96], index: 7, kind: input, shape index: {}]
  %s8 = inlined_call_operand.vmem [shape: f32[32,96], index: 8, kind: input, shape index: {}]
  %s9 = inlined_call_operand.hbm [shape: f32[20,96], index: 9, kind: input, shape index: {}]
  %s10 = inlined_call_operand.vmem [shape: f32[32,96], index: 10, kind: input, shape index: {}]
  %s11 = inlined_call_operand.vmem [shape: f32[1,96], index: 11, kind: input, shape index: {}]
  %s12 = inlined_call_operand.vmem [shape: f32[96,3], index: 12, kind: input, shape index: {}]
  %s13 = inlined_call_operand.vmem [shape: f32[1,3], index: 13, kind: input, shape index: {}]
  %s14 = inlined_call_operand.vmem [shape: f32[8,3], index: 14, kind: output, shape index: {}]
  %s15 = sld [smem:[#allocation0]]
  $region82: #{tpu_custom_call.1} parent=0
    _
  %s17 = ssub.s32 1, %s15
  %s18 = scalar_select 0, %s17, %s15
  $region1: #{tpu_custom_call.1} parent=0
    #allocation2 [shape = 'u8[4096]{0}', space=vmem, size = 0x1000, scoped, tag = 'input window, operand 1, single buffered']
    #allocation3 [shape = 's32[1]{0}', space=sflag, size = 0x4, scoped, tag = 'scoped memory for tpu_custom_call.1']
    #allocation4 [shape = 'u8[4096]{0}', space=vmem, size = 0x1000, scoped, tag = 'input window, operand 2, single buffered']
    #allocation5 [shape = 's32[1]{0}', space=sflag, size = 0x4, scoped, tag = 'scoped memory for tpu_custom_call.1']
    #allocation6 [shape = 'u8[4096]{0}', space=vmem, size = 0x1000, scoped, tag = 'input window, operand 3, single buffered']
    #allocation7 [shape = 'u8[12288]{0}', space=vmem, size = 0x3000, scoped, tag = 'input window, operand 9, single buffered']
    #allocation8 [shape = 's32[1]{0}', space=sflag, size = 0x4, scoped, tag = 'scoped memory for tpu_custom_call.1']
    %19 = vsyncpa [#allocation3], 0
    %20 = vsyncpa [#allocation5], 0
    %21 = vsyncpa [#allocation8], 0
    // Predicated region
    $region2: #{tpu_custom_call.1} parent=1 // pred_check
      _
    $region3: #{tpu_custom_call.1} parent=1 // pred_check_branch
      %23 = sbr.rel (0) target = $region5
    $region4: #{tpu_custom_call.1} parent=1 // pred_region
      _
    $region5: #{tpu_custom_call.1} parent=1 // pred_fallthru
      _
    // Predicated region
    $region6: #{tpu_custom_call.1} parent=1 // pred_check
      _
    $region7: #{tpu_custom_call.1} parent=1 // pred_check_branch
      %25 = sbr.rel (0) target = $region9
    $region8: #{tpu_custom_call.1} parent=1 // pred_region
      %s27 = ssub.s32 128, 128
      %28 = vsyncadd [#allocation3], %s27
      %s30 = sshll.u32 [#allocation2], 4
      %s31 = int_to_ptr.vmem [resolvable:$true] %s30
      %33 = dma.hbm_to_vmem [thread:$0]  %s1, 128, %s31, [#allocation3]
    $region9: #{tpu_custom_call.1} parent=1 // pred_fallthru
      _
    // Predicated region
    $region10: #{tpu_custom_call.1} parent=1 // pred_check
      _
    $region11: #{tpu_custom_call.1} parent=1 // pred_check_branch
      %35 = sbr.rel (0) target = $region13
    $region12: #{tpu_custom_call.1} parent=1 // pred_region
      %s37 = ssub.s32 128, 128
      %38 = vsyncadd [#allocation5], %s37
      %s40 = sshll.u32 [#allocation4], 4
      %s41 = int_to_ptr.vmem [resolvable:$true] %s40
      %43 = dma.hbm_to_vmem [thread:$0]  %s2, 128, %s41, [#allocation5]
    $region13: #{tpu_custom_call.1} parent=1 // pred_fallthru
      _
    // Predicated region
    $region14: #{tpu_custom_call.1} parent=1 // pred_check
      _
    $region15: #{tpu_custom_call.1} parent=1 // pred_check_branch
      %45 = sbr.rel (0) target = $region17
    $region16: #{tpu_custom_call.1} parent=1 // pred_region
      %s47 = ssub.s32 128, 128
      %48 = vsyncadd [#allocation5], %s47
      %s50 = sshll.u32 [#allocation6], 4
      %s51 = int_to_ptr.vmem [resolvable:$true] %s50
      %53 = dma.hbm_to_vmem [thread:$0]  %s3, 128, %s51, [#allocation5]
    $region17: #{tpu_custom_call.1} parent=1 // pred_fallthru
      _
    // Predicated region
    $region18: #{tpu_custom_call.1} parent=1 // pred_check
      _
    $region19: #{tpu_custom_call.1} parent=1 // pred_check_branch
      %55 = sbr.rel (0) target = $region21
    $region20: #{tpu_custom_call.1} parent=1 // pred_region
      _
    $region21: #{tpu_custom_call.1} parent=1 // pred_fallthru
      _
    // Predicated region
    $region22: #{tpu_custom_call.1} parent=1 // pred_check
      _
    $region23: #{tpu_custom_call.1} parent=1 // pred_check_branch
      %57 = sbr.rel (0) target = $region25
    $region24: #{tpu_custom_call.1} parent=1 // pred_region
      _
    $region25: #{tpu_custom_call.1} parent=1 // pred_fallthru
      _
    // Predicated region
    $region26: #{tpu_custom_call.1} parent=1 // pred_check
      _
    $region27: #{tpu_custom_call.1} parent=1 // pred_check_branch
      %59 = sbr.rel (0) target = $region29
    $region28: #{tpu_custom_call.1} parent=1 // pred_region
      _
    $region29: #{tpu_custom_call.1} parent=1 // pred_fallthru
      _
    // Predicated region
    $region30: #{tpu_custom_call.1} parent=1 // pred_check
      _
    $region31: #{tpu_custom_call.1} parent=1 // pred_check_branch
      %61 = sbr.rel (0) target = $region33
    $region32: #{tpu_custom_call.1} parent=1 // pred_region
      _
    $region33: #{tpu_custom_call.1} parent=1 // pred_fallthru
      _
    // Predicated region
    $region34: #{tpu_custom_call.1} parent=1 // pred_check
      _
    $region35: #{tpu_custom_call.1} parent=1 // pred_check_branch
      %63 = sbr.rel (0) target = $region37
    $region36: #{tpu_custom_call.1} parent=1 // pred_region
      _
    $region37: #{tpu_custom_call.1} parent=1 // pred_fallthru
      _
    // Predicated region
    $region38: #{tpu_custom_call.1} parent=1 // pred_check
      _
    $region39: #{tpu_custom_call.1} parent=1 // pred_check_branch
      %65 = sbr.rel (0) target = $region41
    $region40: #{tpu_custom_call.1} parent=1 // pred_region
      %s67 = ssub.s32 384, 384
      %68 = vsyncadd [#allocation8], %s67
      %s69 = sshll.u32 [#allocation7], 4
      %s70 = int_to_ptr.vmem [resolvable:$true] %s69
      %75 = dma.hbm_to_vmem [thread:$0]  %s9, 384, %s70, [#allocation8], 128, 128, 8
    $region41: #{tpu_custom_call.1} parent=1 // pred_fallthru
      _
    // Predicated region
    $region42: #{tpu_custom_call.1} parent=1 // pred_check
      _
    $region43: #{tpu_custom_call.1} parent=1 // pred_check_branch
      %77 = sbr.rel (0) target = $region45
    $region44: #{tpu_custom_call.1} parent=1 // pred_region
      _
    $region45: #{tpu_custom_call.1} parent=1 // pred_fallthru
      _
    // Predicated region
    $region46: #{tpu_custom_call.1} parent=1 // pred_check
      _
    $region47: #{tpu_custom_call.1} parent=1 // pred_check_branch
      %79 = sbr.rel (0) target = $region49
    $region48: #{tpu_custom_call.1} parent=1 // pred_region
      _
    $region49: #{tpu_custom_call.1} parent=1 // pred_fallthru
      _
    // Predicated region
    $region50: #{tpu_custom_call.1} parent=1 // pred_check
      _
    $region51: #{tpu_custom_call.1} parent=1 // pred_check_branch
      %81 = sbr.rel (0) target = $region53
    $region52: #{tpu_custom_call.1} parent=1 // pred_region
      _
    $region53: #{tpu_custom_call.1} parent=1 // pred_fallthru
      _
    // Predicated region
    $region54: #{tpu_custom_call.1} parent=1 // pred_check
      _
    $region55: #{tpu_custom_call.1} parent=1 // pred_check_branch
      %83 = sbr.rel (0) target = $region57
    $region56: #{tpu_custom_call.1} parent=1 // pred_region
      _
    $region57: #{tpu_custom_call.1} parent=1 // pred_fallthru
      _
    // Predicated region
    $region58: #{tpu_custom_call.1} parent=1 // pred_check
      _
    $region59: #{tpu_custom_call.1} parent=1 // pred_check_branch
      %85 = sbr.rel (0) target = $region61
    $region60: #{tpu_custom_call.1} parent=1 // pred_region
      %86 = dma.done [#allocation3], 128
    $region61: #{tpu_custom_call.1} parent=1 // pred_fallthru
      _
    // Predicated region
    $region62: #{tpu_custom_call.1} parent=1 // pred_check
      _
    $region63: #{tpu_custom_call.1} parent=1 // pred_check_branch
      %88 = sbr.rel (0) target = $region65
    $region64: #{tpu_custom_call.1} parent=1 // pred_region
      %89 = dma.done [#allocation5], 128
    $region65: #{tpu_custom_call.1} parent=1 // pred_fallthru
      _
    // Predicated region
    $region66: #{tpu_custom_call.1} parent=1 // pred_check
      _
    $region67: #{tpu_custom_call.1} parent=1 // pred_check_branch
      %91 = sbr.rel (0) target = $region69
    $region68: #{tpu_custom_call.1} parent=1 // pred_region
      %92 = dma.done [#allocation5], 128
    $region69: #{tpu_custom_call.1} parent=1 // pred_fallthru
      _
    // Predicated region
    $region70: #{tpu_custom_call.1} parent=1 // pred_check
      _
    $region71: #{tpu_custom_call.1} parent=1 // pred_check_branch
      %94 = sbr.rel (0) target = $region73
    $region72: #{tpu_custom_call.1} parent=1 // pred_region
      %95 = dma.done [#allocation8], 384
    $region73: #{tpu_custom_call.1} parent=1 // pred_fallthru
      _
    %v96 = vld [vmem:[%s0] sm:$0xff]
    %v97 = vld [vmem:[%s0 + $0x8] sm:$0xff]
    %v98 = vld [vmem:[%s0 + $0x10] sm:$0xff]
    %v99 = vld [vmem:[%s0 + $0x18] sm:$0xff]
    %v100 = vld [vmem:[%s0 + $0x20] sm:$0xff]
    %v101 = vld [vmem:[%s0 + $0x28] sm:$0xff]
    %v102 = vld [vmem:[%s0 + $0x30] sm:$0xff]
    %v103 = vld [vmem:[%s0 + $0x38] sm:$0xff]
    %v104 = vld [vmem:[%s4] sm:$0xff]
    %v105 = vld [vmem:[%s4 + $0x8] sm:$0xff]
    %v106 = vld [vmem:[%s4 + $0x10] sm:$0xff]
    %v107 = vld [vmem:[%s4 + $0x18] sm:$0xff]
    %v108 = vld [vmem:[%s5] sm:$0x1]
    %v110 = vlaneseq
    %v111 = vshrl.u32 %v110, 7
    %v112 = vsub.s32 0, %v111
    %v113 = vrot.slane %v108, %v112
    %vm115 = vcmask 261120
    %v117 = vsel %vm115, %v96, 0
    %v120 = vsel %vm115, %v97, 0
    %v123 = vsel %vm115, %v98, 0
    %v126 = vsel %vm115, %v99, 0
    %v129 = vsel %vm115, %v100, 0
    %v132 = vsel %vm115, %v101, 0
    %v135 = vsel %vm115, %v102, 0
    %v138 = vsel %vm115, %v103, 0
    %140 = vmatprep.subr.mxu0 0.0
    %141 = vmatpush1.msra.mxu0 %v104
    %142 = vmatprep.subr.mxu0 0.0
    %143 = vmatpush1.msra.mxu0 %v105
    %144 = vmatprep.subr.mxu0 0.0
    %145 = vmatpush1.msra.mxu0 %v106
    %146 = vmatprep.subr.mxu0 0.0
    %147 = vmatpush1.msra.mxu0 %v107
    %148 = vmatprep.subr.mxu0 0.0
    %149 = vmatpush1.msra.mxu0 0.0
    %150 = vmatprep.subr.mxu0 0.0
    %151 = vmatpush1.msra.mxu0 0.0
    %152 = vmatprep.subr.mxu0 0.0
    %153 = vmatpush1.msra.mxu0 0.0
    %154 = vmatprep.subr.mxu0 0.0
    %155 = vmatpush1.msra.mxu0 0.0
    %156 = vmatprep.subr.mxu0 0.0
    %157 = vmatpush1.msra.mxu0 0.0
    %158 = vmatprep.subr.mxu0 0.0
    %159 = vmatpush1.msra.mxu0 0.0
    %160 = vmatprep.subr.mxu0 0.0
    %161 = vmatpush1.msra.mxu0 0.0
    %162 = vmatprep.subr.mxu0 0.0
    %163 = vmatpush1.msra.mxu0 0.0
    %164 = vmatprep.subr.mxu0 0.0
    %165 = vmatpush1.msra.mxu0 0.0
    %166 = vmatprep.subr.mxu0 0.0
    %167 = vmatpush1.msra.mxu0 0.0
    %168 = vmatprep.subr.mxu0 0.0
    %169 = vmatpush1.msra.mxu0 0.0
    %170 = vmatprep.subr.mxu0 0.0
    %171 = vmatpush1.msra.mxu0 0.0
    %172 = vmatprep.subr.mxu0 0.0
    %173 = vmatpush1.msra.mxu0 0.0
    %174 = vmatprep.subr.mxu0 0.0
    %175 = vmatpush1.msra.mxu0 0.0
    %176 = vmatprep.subr.mxu0 0.0
    %177 = vmatpush1.msra.mxu0 0.0
    %178 = vmatprep.subr.mxu0 0.0
    %179 = vmatpush1.msra.mxu0 0.0
    %180 = vmatprep.subr.mxu0 0.0
    %181 = vmatpush1.msra.mxu0 0.0
    %182 = vmatprep.subr.mxu0 0.0
    %183 = vmatpush1.msra.mxu0 0.0
    %184 = vmatprep.subr.mxu0 0.0
    %185 = vmatpush1.msra.mxu0 0.0
    %186 = vmatprep.subr.mxu0 0.0
    %187 = vmatpush1.msra.mxu0 0.0
    %188 = vmatprep.subr.mxu0 0.0
    %189 = vmatpush1.msra.mxu0 0.0
    %190 = vmatprep.subr.mxu0 0.0
    %191 = vmatpush1.msra.mxu0 0.0
    %192 = vmatprep.subr.mxu0 0.0
    %193 = vmatpush1.msra.mxu0 0.0
    %194 = vmatprep.subr.mxu0 0.0
    %195 = vmatpush1.msra.mxu0 0.0
    %196 = vmatprep.subr.mxu0 0.0
    %197 = vmatpush1.msra.mxu0 0.0
    %198 = vmatprep.subr.mxu0 0.0
    %199 = vmatpush1.msra.mxu0 0.0
    %200 = vmatprep.subr.mxu0 0.0
    %201 = vmatpush1.msra.mxu0 0.0
    %202 = vmatprep.subr.mxu0 0.0
    %203 = vmatpush1.msra.mxu0 0.0
    %204 = vmatprep.mubr.f32.mxu0 0.0
    %205 = vmatmul.mubr.f32.gmra.mrb[0].mxu0 %v117
    %v206 = vpop.f32.mrb[0].mxu0
    %v207 = vadd.f32 %v113, %v206
    %v208 = vpop.f32.mrb[0].mxu0
    %209 = vmatprep.mubr.f32.mxu0 0.0
    %210 = vmatmul.mubr.f32.gmra.mrb[0].mxu0 %v120
    %v211 = vpop.f32.mrb[0].mxu0
    %v212 = vadd.f32 %v113, %v211
    %v213 = vpop.f32.mrb[0].mxu0
    %214 = vmatprep.mubr.f32.mxu0 0.0
    %215 = vmatmul.mubr.f32.gmra.mrb[0].mxu0 %v123
    %v216 = vpop.f32.mrb[0].mxu0
    %v217 = vadd.f32 %v113, %v216
    %v218 = vpop.f32.mrb[0].mxu0
    %219 = vmatprep.mubr.f32.mxu0 0.0
    %220 = vmatmul.mubr.f32.gmra.mrb[0].mxu0 %v126
    %v221 = vpop.f32.mrb[0].mxu0
    %v222 = vadd.f32 %v113, %v221
    %v223 = vpop.f32.mrb[0].mxu0
    %224 = vmatprep.mubr.f32.mxu0 0.0
    %225 = vmatmul.mubr.f32.gmra.mrb[0].mxu0 %v129
    %v226 = vpop.f32.mrb[0].mxu0
    %v227 = vadd.f32 %v113, %v226
    %v228 = vpop.f32.mrb[0].mxu0
    %229 = vmatprep.mubr.f32.mxu0 0.0
    %230 = vmatmul.mubr.f32.gmra.mrb[0].mxu0 %v132
    %v231 = vpop.f32.mrb[0].mxu0
    %v232 = vadd.f32 %v113, %v231
    %v233 = vpop.f32.mrb[0].mxu0
    %234 = vmatprep.mubr.f32.mxu0 0.0
    %235 = vmatmul.mubr.f32.gmra.mrb[0].mxu0 %v135
    %v236 = vpop.f32.mrb[0].mxu0
    %v237 = vadd.f32 %v113, %v236
    %v238 = vpop.f32.mrb[0].mxu0
    %239 = vmatprep.mubr.f32.mxu0 0.0
    %240 = vmatmul.mubr.f32.gmra.mrb[0].mxu0 %v138
    %v241 = vpop.f32.mrb[0].mxu0
    %v242 = vadd.f32 %v113, %v241
    %v243 = vpop.f32.mrb[0].mxu0
    %244 = vdwg.mxu0
    %v245 = vtanh.pop %v207
    %v246 = vtanh.pop %v212
    %v247 = vtanh.pop %v217
    %v248 = vtanh.pop %v222
    %v249 = vtanh.pop %v227
    %v250 = vtanh.pop %v232
    %v251 = vtanh.pop %v237
    %v252 = vtanh.pop %v242
    %v253 = vld [vmem:[%s6] sm:$0x1]
    %v255 = vlaneseq
    %v256 = vshrl.u32 %v255, 7
    %v257 = vsub.s32 0, %v256
    %v258 = vrot.slane %v253, %v257
    %v260 = vmul.f32 %v245, %v258
    %v261 = vmul.f32 %v246, %v258
    %v262 = vmul.f32 %v247, %v258
    %v263 = vmul.f32 %v248, %v258
    %v264 = vmul.f32 %v249, %v258
    %v265 = vmul.f32 %v250, %v258
    %v266 = vmul.f32 %v251, %v258
    %v267 = vmul.f32 %v252, %v258
    %vm268 = vcmask 130048
    %v269 = vsel %vm268, %v260, 0.0
    %270 = vadd.xlane.f32.xlu0 %v269
    %v271 = vpop.xlane.xlu0 %270
    %v272 = vsel %vm268, %v261, 0.0
    %273 = vadd.xlane.f32.xlu0 %v272
    %v274 = vpop.xlane.xlu0 %273
    %v275 = vsel %vm268, %v262, 0.0
    %276 = vadd.xlane.f32.xlu0 %v275
    %v277 = vpop.xlane.xlu0 %276
    %v278 = vsel %vm268, %v263, 0.0
    %279 = vadd.xlane.f32.xlu0 %v278
    %v280 = vpop.xlane.xlu0 %279
    %v281 = vsel %vm268, %v264, 0.0
    %282 = vadd.xlane.f32.xlu0 %v281
    %v283 = vpop.xlane.xlu0 %282
    %v284 = vsel %vm268, %v265, 0.0
    %285 = vadd.xlane.f32.xlu0 %v284
    %v286 = vpop.xlane.xlu0 %285
    %v287 = vsel %vm268, %v266, 0.0
    %288 = vadd.xlane.f32.xlu0 %v287
    %v289 = vpop.xlane.xlu0 %288
    %v290 = vsel %vm268, %v267, 0.0
    %291 = vadd.xlane.f32.xlu0 %v290
    %v292 = vpop.xlane.xlu0 %291
    %v293 = vrot.slane %v271, 4
    %v294 = vmax.f32 %v271, %v293
    %v295 = vrot.slane %v294, 2
    %v296 = vmax.f32 %v294, %v295
    %v297 = vrot.slane %v296, 1
    %v298 = vmax.f32 %v296, %v297
    %v299 = vrot.slane %v274, 4
    %v300 = vmax.f32 %v274, %v299
    %v301 = vrot.slane %v300, 2
    %v302 = vmax.f32 %v300, %v301
    %v303 = vrot.slane %v302, 1
    %v304 = vmax.f32 %v302, %v303
    %v305 = vrot.slane %v277, 4
    %v306 = vmax.f32 %v277, %v305
    %v307 = vrot.slane %v306, 2
    %v308 = vmax.f32 %v306, %v307
    %v309 = vrot.slane %v308, 1
    %v310 = vmax.f32 %v308, %v309
    %v311 = vrot.slane %v280, 4
    %v312 = vmax.f32 %v280, %v311
    %v313 = vrot.slane %v312, 2
    %v314 = vmax.f32 %v312, %v313
    %v315 = vrot.slane %v314, 1
    %v316 = vmax.f32 %v314, %v315
    %v317 = vrot.slane %v283, 4
    %v318 = vmax.f32 %v283, %v317
    %v319 = vrot.slane %v318, 2
    %v320 = vmax.f32 %v318, %v319
    %v321 = vrot.slane %v320, 1
    %v322 = vmax.f32 %v320, %v321
    %v323 = vrot.slane %v286, 4
    %v324 = vmax.f32 %v286, %v323
    %v325 = vrot.slane %v324, 2
    %v326 = vmax.f32 %v324, %v325
    %v327 = vrot.slane %v326, 1
    %v328 = vmax.f32 %v326, %v327
    %v329 = vrot.slane %v289, 4
    %v330 = vmax.f32 %v289, %v329
    %v331 = vrot.slane %v330, 2
    %v332 = vmax.f32 %v330, %v331
    %v333 = vrot.slane %v332, 1
    %v334 = vmax.f32 %v332, %v333
    %v335 = vrot.slane %v292, 4
    %v336 = vmax.f32 %v292, %v335
    %v337 = vrot.slane %v336, 2
    %v338 = vmax.f32 %v336, %v337
    %v339 = vrot.slane %v338, 1
    %v340 = vmax.f32 %v338, %v339
    %v341 = vsub.f32 %v271, %v298
    %v342 = vsub.f32 %v274, %v304
    %v343 = vsub.f32 %v277, %v310
    %v344 = vsub.f32 %v280, %v316
    %v345 = vsub.f32 %v283, %v322
    %v346 = vsub.f32 %v286, %v328
    %v347 = vsub.f32 %v289, %v334
    %v348 = vsub.f32 %v292, %v340
    %v349 = vmul.f32 %v341, 1.442695
    %v350 = vpow.pop %v349
    %v351 = vmul.f32 %v342, 1.442695
    %v352 = vpow.pop %v351
    %v353 = vmul.f32 %v343, 1.442695
    %v354 = vpow.pop %v353
    %v355 = vmul.f32 %v344, 1.442695
    %v356 = vpow.pop %v355
    %v357 = vmul.f32 %v345, 1.442695
    %v358 = vpow.pop %v357
    %v359 = vmul.f32 %v346, 1.442695
    %v360 = vpow.pop %v359
    %v361 = vmul.f32 %v347, 1.442695
    %v362 = vpow.pop %v361
    %v363 = vmul.f32 %v348, 1.442695
    %v364 = vpow.pop %v363
    %v365 = vrot.slane %v350, 4
    %v366 = vadd.f32 %v350, %v365
    %v367 = vrot.slane %v366, 2
    %v368 = vadd.f32 %v366, %v367
    %v369 = vrot.slane %v368, 1
    %v370 = vadd.f32 %v368, %v369
    %v371 = vrot.slane %v352, 4
    %v372 = vadd.f32 %v352, %v371
    %v373 = vrot.slane %v372, 2
    %v374 = vadd.f32 %v372, %v373
    %v375 = vrot.slane %v374, 1
    %v376 = vadd.f32 %v374, %v375
    %v377 = vrot.slane %v354, 4
    %v378 = vadd.f32 %v354, %v377
    %v379 = vrot.slane %v378, 2
    %v380 = vadd.f32 %v378, %v379
    %v381 = vrot.slane %v380, 1
    %v382 = vadd.f32 %v380, %v381
    %v383 = vrot.slane %v356, 4
    %v384 = vadd.f32 %v356, %v383
    %v385 = vrot.slane %v384, 2
    %v386 = vadd.f32 %v384, %v385
    %v387 = vrot.slane %v386, 1
    %v388 = vadd.f32 %v386, %v387
    %v389 = vrot.slane %v358, 4
    %v390 = vadd.f32 %v358, %v389
    %v391 = vrot.slane %v390, 2
    %v392 = vadd.f32 %v390, %v391
    %v393 = vrot.slane %v392, 1
    %v394 = vadd.f32 %v392, %v393
    %v395 = vrot.slane %v360, 4
    %v396 = vadd.f32 %v360, %v395
    %v397 = vrot.slane %v396, 2
    %v398 = vadd.f32 %v396, %v397
    %v399 = vrot.slane %v398, 1
    %v400 = vadd.f32 %v398, %v399
    %v401 = vrot.slane %v362, 4
    %v402 = vadd.f32 %v362, %v401
    %v403 = vrot.slane %v402, 2
    %v404 = vadd.f32 %v402, %v403
    %v405 = vrot.slane %v404, 1
    %v406 = vadd.f32 %v404, %v405
    %v407 = vrot.slane %v364, 4
    %v408 = vadd.f32 %v364, %v407
    %v409 = vrot.slane %v408, 2
    %v410 = vadd.f32 %v408, %v409
    %v411 = vrot.slane %v410, 1
    %v412 = vadd.f32 %v410, %v411
    %v413 = vrcp.pop %v370
    %v414 = vmul.f32 %v350, %v413
    %v415 = vrcp.pop %v376
    %v416 = vmul.f32 %v352, %v415
    %v417 = vrcp.pop %v382
    %v418 = vmul.f32 %v354, %v417
    %v419 = vrcp.pop %v388
    %v420 = vmul.f32 %v356, %v419
    %v421 = vrcp.pop %v394
    %v422 = vmul.f32 %v358, %v421
    %v423 = vrcp.pop %v400
    %v424 = vmul.f32 %v360, %v423
    %v425 = vrcp.pop %v406
    %v426 = vmul.f32 %v362, %v425
    %v427 = vrcp.pop %v412
    %v428 = vmul.f32 %v364, %v427
    %v429 = vmul.f32 %v414, %v96
    %v430 = vmul.f32 %v416, %v97
    %v431 = vmul.f32 %v418, %v98
    %v432 = vmul.f32 %v420, %v99
    %v433 = vmul.f32 %v422, %v100
    %v434 = vmul.f32 %v424, %v101
    %v435 = vmul.f32 %v426, %v102
    %v436 = vmul.f32 %v428, %v103
    %v437 = vsel %vm115, %v429, 0.0
    %v438 = vrot.slane %v437, 4
    %v439 = vadd.f32 %v437, %v438
    %v440 = vrot.slane %v439, 2
    %v441 = vadd.f32 %v439, %v440
    %v442 = vrot.slane %v441, 1
    %v443 = vadd.f32 %v441, %v442
    %v444 = vsel %vm115, %v430, 0.0
    %v445 = vrot.slane %v444, 4
    %v446 = vadd.f32 %v444, %v445
    %v447 = vrot.slane %v446, 2
    %v448 = vadd.f32 %v446, %v447
    %v449 = vrot.slane %v448, 1
    %v450 = vadd.f32 %v448, %v449
    %v451 = vsel %vm115, %v431, 0.0
    %v452 = vrot.slane %v451, 4
    %v453 = vadd.f32 %v451, %v452
    %v454 = vrot.slane %v453, 2
    %v455 = vadd.f32 %v453, %v454
    %v456 = vrot.slane %v455, 1
    %v457 = vadd.f32 %v455, %v456
    %v458 = vsel %vm115, %v432, 0.0
    %v459 = vrot.slane %v458, 4
    %v460 = vadd.f32 %v458, %v459
    %v461 = vrot.slane %v460, 2
    %v462 = vadd.f32 %v460, %v461
    %v463 = vrot.slane %v462, 1
    %v464 = vadd.f32 %v462, %v463
    %v465 = vsel %vm115, %v433, 0.0
    %v466 = vrot.slane %v465, 4
    %v467 = vadd.f32 %v465, %v466
    %v468 = vrot.slane %v467, 2
    %v469 = vadd.f32 %v467, %v468
    %v470 = vrot.slane %v469, 1
    %v471 = vadd.f32 %v469, %v470
    %v472 = vsel %vm115, %v434, 0.0
    %v473 = vrot.slane %v472, 4
    %v474 = vadd.f32 %v472, %v473
    %v475 = vrot.slane %v474, 2
    %v476 = vadd.f32 %v474, %v475
    %v477 = vrot.slane %v476, 1
    %v478 = vadd.f32 %v476, %v477
    %v479 = vsel %vm115, %v435, 0.0
    %v480 = vrot.slane %v479, 4
    %v481 = vadd.f32 %v479, %v480
    %v482 = vrot.slane %v481, 2
    %v483 = vadd.f32 %v481, %v482
    %v484 = vrot.slane %v483, 1
    %v485 = vadd.f32 %v483, %v484
    %v486 = vsel %vm115, %v436, 0.0
    %v487 = vrot.slane %v486, 4
    %v488 = vadd.f32 %v486, %v487
    %v489 = vrot.slane %v488, 2
    %v490 = vadd.f32 %v488, %v489
    %v491 = vrot.slane %v490, 1
    %v492 = vadd.f32 %v490, %v491
    %v493 = vld [vmem:[#allocation2] sm:$0xff]
    %v494 = vld [vmem:[%s7] sm:$0xff]
    %v495 = vld [vmem:[%s7 + $0x8] sm:$0xff]
    %v496 = vld [vmem:[%s7 + $0x10] sm:$0xff]
    %v497 = vld [vmem:[%s7 + $0x18] sm:$0xff]
    %v498 = vld [vmem:[%s8] sm:$0xff]
    %v499 = vld [vmem:[%s8 + $0x8] sm:$0xff]
    %v500 = vld [vmem:[%s8 + $0x10] sm:$0xff]
    %v501 = vld [vmem:[%s8 + $0x18] sm:$0xff]
    %vm510 = vcmask 1041409
    %v511 = vsel %vm510, %v450, %v443
    %vm512 = vcmask 1042434
    %v513 = vsel %vm512, %v457, %v511
    %vm514 = vcmask 1043459
    %v515 = vsel %vm514, %v464, %v513
    %vm516 = vcmask 1044484
    %v517 = vsel %vm516, %v471, %v515
    %vm518 = vcmask 1045509
    %v519 = vsel %vm518, %v478, %v517
    %vm520 = vcmask 1046534
    %v521 = vsel %vm520, %v485, %v519
    %vm522 = vcmask 1047559
    %v523 = vsel %vm522, %v492, %v521
    %v524 = vsel %vm115, %v523, 0
    %526 = vmatprep.subr.mxu0 0.0
    %527 = vmatpush1.msra.mxu0 %v498
    %528 = vmatprep.subr.mxu0 0.0
    %529 = vmatpush1.msra.mxu0 %v499
    %530 = vmatprep.subr.mxu0 0.0
    %531 = vmatpush1.msra.mxu0 %v500
    %532 = vmatprep.subr.mxu0 0.0
    %533 = vmatpush1.msra.mxu0 %v501
    %534 = vmatprep.subr.mxu0 0.0
    %535 = vmatpush1.msra.mxu0 0.0
    %536 = vmatprep.subr.mxu0 0.0
    %537 = vmatpush1.msra.mxu0 0.0
    %538 = vmatprep.subr.mxu0 0.0
    %539 = vmatpush1.msra.mxu0 0.0
    %540 = vmatprep.subr.mxu0 0.0
    %541 = vmatpush1.msra.mxu0 0.0
    %542 = vmatprep.subr.mxu0 0.0
    %543 = vmatpush1.msra.mxu0 0.0
    %544 = vmatprep.subr.mxu0 0.0
    %545 = vmatpush1.msra.mxu0 0.0
    %546 = vmatprep.subr.mxu0 0.0
    %547 = vmatpush1.msra.mxu0 0.0
    %548 = vmatprep.subr.mxu0 0.0
    %549 = vmatpush1.msra.mxu0 0.0
    %550 = vmatprep.subr.mxu0 0.0
    %551 = vmatpush1.msra.mxu0 0.0
    %552 = vmatprep.subr.mxu0 0.0
    %553 = vmatpush1.msra.mxu0 0.0
    %554 = vmatprep.subr.mxu0 0.0
    %555 = vmatpush1.msra.mxu0 0.0
    %556 = vmatprep.subr.mxu0 0.0
    %557 = vmatpush1.msra.mxu0 0.0
    %558 = vmatprep.subr.mxu0 0.0
    %559 = vmatpush1.msra.mxu0 0.0
    %560 = vmatprep.subr.mxu0 0.0
    %561 = vmatpush1.msra.mxu0 0.0
    %562 = vmatprep.subr.mxu0 0.0
    %563 = vmatpush1.msra.mxu0 0.0
    %564 = vmatprep.subr.mxu0 0.0
    %565 = vmatpush1.msra.mxu0 0.0
    %566 = vmatprep.subr.mxu0 0.0
    %567 = vmatpush1.msra.mxu0 0.0
    %568 = vmatprep.subr.mxu0 0.0
    %569 = vmatpush1.msra.mxu0 0.0
    %570 = vmatprep.subr.mxu0 0.0
    %571 = vmatpush1.msra.mxu0 0.0
    %572 = vmatprep.subr.mxu0 0.0
    %573 = vmatpush1.msra.mxu0 0.0
    %574 = vmatprep.subr.mxu0 0.0
    %575 = vmatpush1.msra.mxu0 0.0
    %576 = vmatprep.subr.mxu0 0.0
    %577 = vmatpush1.msra.mxu0 0.0
    %578 = vmatprep.subr.mxu0 0.0
    %579 = vmatpush1.msra.mxu0 0.0
    %580 = vmatprep.subr.mxu0 0.0
    %581 = vmatpush1.msra.mxu0 0.0
    %582 = vmatprep.subr.mxu0 0.0
    %583 = vmatpush1.msra.mxu0 0.0
    %584 = vmatprep.subr.mxu0 0.0
    %585 = vmatpush1.msra.mxu0 0.0
    %586 = vmatprep.subr.mxu0 0.0
    %587 = vmatpush1.msra.mxu0 0.0
    %588 = vmatprep.subr.mxu0 0.0
    %589 = vmatpush1.msra.mxu0 0.0
    %590 = vmatprep.mubr.f32.mxu0 0.0
    %591 = vmatmul.mubr.f32.gmra.mrb[0].mxu0 %v524
    %v592 = vpop.f32.mrb[0].mxu0
    %v593 = vadd.f32 0.0, %v592
    %v594 = vpop.f32.mrb[0].mxu0
    %595 = vdwg.mxu0
    %v597 = vsel %vm115, %v493, 0
    %599 = vmatprep.subr.mxu0 0.0
    %600 = vmatpush1.msra.mxu0 %v494
    %601 = vmatprep.subr.mxu0 0.0
    %602 = vmatpush1.msra.mxu0 %v495
    %603 = vmatprep.subr.mxu0 0.0
    %604 = vmatpush1.msra.mxu0 %v496
    %605 = vmatprep.subr.mxu0 0.0
    %606 = vmatpush1.msra.mxu0 %v497
    %607 = vmatprep.subr.mxu0 0.0
    %608 = vmatpush1.msra.mxu0 0.0
    %609 = vmatprep.subr.mxu0 0.0
    %610 = vmatpush1.msra.mxu0 0.0
    %611 = vmatprep.subr.mxu0 0.0
    %612 = vmatpush1.msra.mxu0 0.0
    %613 = vmatprep.subr.mxu0 0.0
    %614 = vmatpush1.msra.mxu0 0.0
    %615 = vmatprep.subr.mxu0 0.0
    %616 = vmatpush1.msra.mxu0 0.0
    %617 = vmatprep.subr.mxu0 0.0
    %618 = vmatpush1.msra.mxu0 0.0
    %619 = vmatprep.subr.mxu0 0.0
    %620 = vmatpush1.msra.mxu0 0.0
    %621 = vmatprep.subr.mxu0 0.0
    %622 = vmatpush1.msra.mxu0 0.0
    %623 = vmatprep.subr.mxu0 0.0
    %624 = vmatpush1.msra.mxu0 0.0
    %625 = vmatprep.subr.mxu0 0.0
    %626 = vmatpush1.msra.mxu0 0.0
    %627 = vmatprep.subr.mxu0 0.0
    %628 = vmatpush1.msra.mxu0 0.0
    %629 = vmatprep.subr.mxu0 0.0
    %630 = vmatpush1.msra.mxu0 0.0
    %631 = vmatprep.subr.mxu0 0.0
    %632 = vmatpush1.msra.mxu0 0.0
    %633 = vmatprep.subr.mxu0 0.0
    %634 = vmatpush1.msra.mxu0 0.0
    %635 = vmatprep.subr.mxu0 0.0
    %636 = vmatpush1.msra.mxu0 0.0
    %637 = vmatprep.subr.mxu0 0.0
    %638 = vmatpush1.msra.mxu0 0.0
    %639 = vmatprep.subr.mxu0 0.0
    %640 = vmatpush1.msra.mxu0 0.0
    %641 = vmatprep.subr.mxu0 0.0
    %642 = vmatpush1.msra.mxu0 0.0
    %643 = vmatprep.subr.mxu0 0.0
    %644 = vmatpush1.msra.mxu0 0.0
    %645 = vmatprep.subr.mxu0 0.0
    %646 = vmatpush1.msra.mxu0 0.0
    %647 = vmatprep.subr.mxu0 0.0
    %648 = vmatpush1.msra.mxu0 0.0
    %649 = vmatprep.subr.mxu0 0.0
    %650 = vmatpush1.msra.mxu0 0.0
    %651 = vmatprep.subr.mxu0 0.0
    %652 = vmatpush1.msra.mxu0 0.0
    %653 = vmatprep.subr.mxu0 0.0
    %654 = vmatpush1.msra.mxu0 0.0
    %655 = vmatprep.subr.mxu0 0.0
    %656 = vmatpush1.msra.mxu0 0.0
    %657 = vmatprep.subr.mxu0 0.0
    %658 = vmatpush1.msra.mxu0 0.0
    %659 = vmatprep.subr.mxu0 0.0
    %660 = vmatpush1.msra.mxu0 0.0
    %661 = vmatprep.subr.mxu0 0.0
    %662 = vmatpush1.msra.mxu0 0.0
    %663 = vmatprep.mubr.f32.mxu0 0.0
    %664 = vmatmul.mubr.f32.gmra.mrb[0].mxu0 %v597
    %v665 = vpop.f32.mrb[0].mxu0
    %v666 = vadd.f32 %v593, %v665
    %v667 = vpop.f32.mrb[0].mxu0
    %668 = vdwg.mxu0
    %v669 = vld [vmem:[#allocation4] sm:$0xff]
    %v670 = vld [vmem:[#allocation7] sm:$0xff]
    %v671 = vld [vmem:[#allocation7 + $0x8] sm:$0xff]
    %v672 = vld [vmem:[#allocation7 + $0x10] sm:$0xf]
    %vm673 = vcmask 162816
    %v675 = vsel %vm673, %v669, 0
    %vm677 = vcmask 1043456
    %v679 = vsel %vm677, %v672, 0
    %681 = vmatprep.subr.mxu0 0.0
    %682 = vmatpush1.msra.mxu0 %v670
    %683 = vmatprep.subr.mxu0 0.0
    %684 = vmatpush1.msra.mxu0 %v671
    %685 = vmatprep.subr.mxu0 0.0
    %686 = vmatpush1.msra.mxu0 %v679
    %687 = vmatprep.subr.mxu0 0.0
    %688 = vmatpush1.msra.mxu0 0.0
    %689 = vmatprep.subr.mxu0 0.0
    %690 = vmatpush1.msra.mxu0 0.0
    %691 = vmatprep.subr.mxu0 0.0
    %692 = vmatpush1.msra.mxu0 0.0
    %693 = vmatprep.subr.mxu0 0.0
    %694 = vmatpush1.msra.mxu0 0.0
    %695 = vmatprep.subr.mxu0 0.0
    %696 = vmatpush1.msra.mxu0 0.0
    %697 = vmatprep.subr.mxu0 0.0
    %698 = vmatpush1.msra.mxu0 0.0
    %699 = vmatprep.subr.mxu0 0.0
    %700 = vmatpush1.msra.mxu0 0.0
    %701 = vmatprep.subr.mxu0 0.0
    %702 = vmatpush1.msra.mxu0 0.0
    %703 = vmatprep.subr.mxu0 0.0
    %704 = vmatpush1.msra.mxu0 0.0
    %705 = vmatprep.subr.mxu0 0.0
    %706 = vmatpush1.msra.mxu0 0.0
    %707 = vmatprep.subr.mxu0 0.0
    %708 = vmatpush1.msra.mxu0 0.0
    %709 = vmatprep.subr.mxu0 0.0
    %710 = vmatpush1.msra.mxu0 0.0
    %711 = vmatprep.subr.mxu0 0.0
    %712 = vmatpush1.msra.mxu0 0.0
    %713 = vmatprep.subr.mxu0 0.0
    %714 = vmatpush1.msra.mxu0 0.0
    %715 = vmatprep.subr.mxu0 0.0
    %716 = vmatpush1.msra.mxu0 0.0
    %717 = vmatprep.subr.mxu0 0.0
    %718 = vmatpush1.msra.mxu0 0.0
    %719 = vmatprep.subr.mxu0 0.0
    %720 = vmatpush1.msra.mxu0 0.0
    %721 = vmatprep.subr.mxu0 0.0
    %722 = vmatpush1.msra.mxu0 0.0
    %723 = vmatprep.subr.mxu0 0.0
    %724 = vmatpush1.msra.mxu0 0.0
    %725 = vmatprep.subr.mxu0 0.0
    %726 = vmatpush1.msra.mxu0 0.0
    %727 = vmatprep.subr.mxu0 0.0
    %728 = vmatpush1.msra.mxu0 0.0
    %729 = vmatprep.subr.mxu0 0.0
    %730 = vmatpush1.msra.mxu0 0.0
    %731 = vmatprep.subr.mxu0 0.0
    %732 = vmatpush1.msra.mxu0 0.0
    %733 = vmatprep.subr.mxu0 0.0
    %734 = vmatpush1.msra.mxu0 0.0
    %735 = vmatprep.subr.mxu0 0.0
    %736 = vmatpush1.msra.mxu0 0.0
    %737 = vmatprep.subr.mxu0 0.0
    %738 = vmatpush1.msra.mxu0 0.0
    %739 = vmatprep.subr.mxu0 0.0
    %740 = vmatpush1.msra.mxu0 0.0
    %741 = vmatprep.subr.mxu0 0.0
    %742 = vmatpush1.msra.mxu0 0.0
    %743 = vmatprep.subr.mxu0 0.0
    %744 = vmatpush1.msra.mxu0 0.0
    %745 = vmatprep.mubr.f32.mxu0 0.0
    %746 = vmatmul.mubr.f32.gmra.mrb[0].mxu0 %v675
    %v747 = vpop.f32.mrb[0].mxu0
    %v748 = vadd.f32 0.0, %v747
    %v749 = vpop.f32.mrb[0].mxu0
    %750 = vdwg.mxu0
    %v751 = vadd.f32 %v666, %v748
    %v752 = vld [vmem:[#allocation6] sm:$0xff]
    %v753 = vld [vmem:[%s10] sm:$0xff]
    %v754 = vld [vmem:[%s10 + $0x8] sm:$0xff]
    %v755 = vld [vmem:[%s10 + $0x10] sm:$0xff]
    %v756 = vld [vmem:[%s10 + $0x18] sm:$0xff]
    %v758 = vsel %vm115, %v752, 0
    %760 = vmatprep.subr.mxu0 0.0
    %761 = vmatpush1.msra.mxu0 %v753
    %762 = vmatprep.subr.mxu0 0.0
    %763 = vmatpush1.msra.mxu0 %v754
    %764 = vmatprep.subr.mxu0 0.0
    %765 = vmatpush1.msra.mxu0 %v755
    %766 = vmatprep.subr.mxu0 0.0
    %767 = vmatpush1.msra.mxu0 %v756
    %768 = vmatprep.subr.mxu0 0.0
    %769 = vmatpush1.msra.mxu0 0.0
    %770 = vmatprep.subr.mxu0 0.0
    %771 = vmatpush1.msra.mxu0 0.0
    %772 = vmatprep.subr.mxu0 0.0
    %773 = vmatpush1.msra.mxu0 0.0
    %774 = vmatprep.subr.mxu0 0.0
    %775 = vmatpush1.msra.mxu0 0.0
    %776 = vmatprep.subr.mxu0 0.0
    %777 = vmatpush1.msra.mxu0 0.0
    %778 = vmatprep.subr.mxu0 0.0
    %779 = vmatpush1.msra.mxu0 0.0
    %780 = vmatprep.subr.mxu0 0.0
    %781 = vmatpush1.msra.mxu0 0.0
    %782 = vmatprep.subr.mxu0 0.0
    %783 = vmatpush1.msra.mxu0 0.0
    %784 = vmatprep.subr.mxu0 0.0
    %785 = vmatpush1.msra.mxu0 0.0
    %786 = vmatprep.subr.mxu0 0.0
    %787 = vmatpush1.msra.mxu0 0.0
    %788 = vmatprep.subr.mxu0 0.0
    %789 = vmatpush1.msra.mxu0 0.0
    %790 = vmatprep.subr.mxu0 0.0
    %791 = vmatpush1.msra.mxu0 0.0
    %792 = vmatprep.subr.mxu0 0.0
    %793 = vmatpush1.msra.mxu0 0.0
    %794 = vmatprep.subr.mxu0 0.0
    %795 = vmatpush1.msra.mxu0 0.0
    %796 = vmatprep.subr.mxu0 0.0
    %797 = vmatpush1.msra.mxu0 0.0
    %798 = vmatprep.subr.mxu0 0.0
    %799 = vmatpush1.msra.mxu0 0.0
    %800 = vmatprep.subr.mxu0 0.0
    %801 = vmatpush1.msra.mxu0 0.0
    %802 = vmatprep.subr.mxu0 0.0
    %803 = vmatpush1.msra.mxu0 0.0
    %804 = vmatprep.subr.mxu0 0.0
    %805 = vmatpush1.msra.mxu0 0.0
    %806 = vmatprep.subr.mxu0 0.0
    %807 = vmatpush1.msra.mxu0 0.0
    %808 = vmatprep.subr.mxu0 0.0
    %809 = vmatpush1.msra.mxu0 0.0
    %810 = vmatprep.subr.mxu0 0.0
    %811 = vmatpush1.msra.mxu0 0.0
    %812 = vmatprep.subr.mxu0 0.0
    %813 = vmatpush1.msra.mxu0 0.0
    %814 = vmatprep.subr.mxu0 0.0
    %815 = vmatpush1.msra.mxu0 0.0
    %816 = vmatprep.subr.mxu0 0.0
    %817 = vmatpush1.msra.mxu0 0.0
    %818 = vmatprep.subr.mxu0 0.0
    %819 = vmatpush1.msra.mxu0 0.0
    %820 = vmatprep.subr.mxu0 0.0
    %821 = vmatpush1.msra.mxu0 0.0
    %822 = vmatprep.subr.mxu0 0.0
    %823 = vmatpush1.msra.mxu0 0.0
    %824 = vmatprep.mubr.f32.mxu0 0.0
    %825 = vmatmul.mubr.f32.gmra.mrb[0].mxu0 %v758
    %v826 = vpop.f32.mrb[0].mxu0
    %v827 = vadd.f32 0.0, %v826
    %v828 = vpop.f32.mrb[0].mxu0
    %829 = vdwg.mxu0
    %v830 = vadd.f32 %v751, %v827
    %v831 = vld [vmem:[%s11] sm:$0x1]
    %v833 = vlaneseq
    %v834 = vshrl.u32 %v833, 7
    %v835 = vsub.s32 0, %v834
    %v836 = vrot.slane %v831, %v835
    %v838 = vadd.f32 %v830, %v836
    %vm839 = vcmp.ge.f32.partialorder %v838, 0.0
    %v840 = vmul.f32 %v838, 0.1
    %v841 = vsel %vm839, %v838, %v840
    %v842 = vld [vmem:[%s12] sm:$0xff]
    %v843 = vld [vmem:[%s12 + $0x8] sm:$0xff]
    %v844 = vld [vmem:[%s12 + $0x10] sm:$0xff]
    %v845 = vld [vmem:[%s12 + $0x18] sm:$0xff]
    %v846 = vld [vmem:[%s12 + $0x20] sm:$0xff]
    %v847 = vld [vmem:[%s12 + $0x28] sm:$0xff]
    %v848 = vld [vmem:[%s12 + $0x30] sm:$0xff]
    %v849 = vld [vmem:[%s12 + $0x38] sm:$0xff]
    %v850 = vld [vmem:[%s12 + $0x40] sm:$0xff]
    %v851 = vld [vmem:[%s12 + $0x48] sm:$0xff]
    %v852 = vld [vmem:[%s12 + $0x50] sm:$0xff]
    %v853 = vld [vmem:[%s12 + $0x58] sm:$0xff]
    %v854 = vld [vmem:[%s13] sm:$0x1]
    %v856 = vlaneseq
    %v857 = vshrl.u32 %v856, 7
    %v858 = vsub.s32 0, %v857
    %v859 = vrot.slane %v854, %v858
    %vm861 = vcmask 785408
    %v863 = vsel %vm861, %v841, 0
    %865 = vmatprep.subr.mxu0 0.0
    %866 = vmatpush1.msra.mxu0 %v842
    %867 = vmatprep.subr.mxu0 0.0
    %868 = vmatpush1.msra.mxu0 %v843
    %869 = vmatprep.subr.mxu0 0.0
    %870 = vmatpush1.msra.mxu0 %v844
    %871 = vmatprep.subr.mxu0 0.0
    %872 = vmatpush1.msra.mxu0 %v845
    %873 = vmatprep.subr.mxu0 0.0
    %874 = vmatpush1.msra.mxu0 %v846
    %875 = vmatprep.subr.mxu0 0.0
    %876 = vmatpush1.msra.mxu0 %v847
    %877 = vmatprep.subr.mxu0 0.0
    %878 = vmatpush1.msra.mxu0 %v848
    %879 = vmatprep.subr.mxu0 0.0
    %880 = vmatpush1.msra.mxu0 %v849
    %881 = vmatprep.subr.mxu0 0.0
    %882 = vmatpush1.msra.mxu0 %v850
    %883 = vmatprep.subr.mxu0 0.0
    %884 = vmatpush1.msra.mxu0 %v851
    %885 = vmatprep.subr.mxu0 0.0
    %886 = vmatpush1.msra.mxu0 %v852
    %887 = vmatprep.subr.mxu0 0.0
    %888 = vmatpush1.msra.mxu0 %v853
    %889 = vmatprep.subr.mxu0 0.0
    %890 = vmatpush1.msra.mxu0 0.0
    %891 = vmatprep.subr.mxu0 0.0
    %892 = vmatpush1.msra.mxu0 0.0
    %893 = vmatprep.subr.mxu0 0.0
    %894 = vmatpush1.msra.mxu0 0.0
    %895 = vmatprep.subr.mxu0 0.0
    %896 = vmatpush1.msra.mxu0 0.0
    %897 = vmatprep.subr.mxu0 0.0
    %898 = vmatpush1.msra.mxu0 0.0
    %899 = vmatprep.subr.mxu0 0.0
    %900 = vmatpush1.msra.mxu0 0.0
    %901 = vmatprep.subr.mxu0 0.0
    %902 = vmatpush1.msra.mxu0 0.0
    %903 = vmatprep.subr.mxu0 0.0
    %904 = vmatpush1.msra.mxu0 0.0
    %905 = vmatprep.subr.mxu0 0.0
    %906 = vmatpush1.msra.mxu0 0.0
    %907 = vmatprep.subr.mxu0 0.0
    %908 = vmatpush1.msra.mxu0 0.0
    %909 = vmatprep.subr.mxu0 0.0
    %910 = vmatpush1.msra.mxu0 0.0
    %911 = vmatprep.subr.mxu0 0.0
    %912 = vmatpush1.msra.mxu0 0.0
    %913 = vmatprep.subr.mxu0 0.0
    %914 = vmatpush1.msra.mxu0 0.0
    %915 = vmatprep.subr.mxu0 0.0
    %916 = vmatpush1.msra.mxu0 0.0
    %917 = vmatprep.subr.mxu0 0.0
    %918 = vmatpush1.msra.mxu0 0.0
    %919 = vmatprep.subr.mxu0 0.0
    %920 = vmatpush1.msra.mxu0 0.0
    %921 = vmatprep.subr.mxu0 0.0
    %922 = vmatpush1.msra.mxu0 0.0
    %923 = vmatprep.subr.mxu0 0.0
    %924 = vmatpush1.msra.mxu0 0.0
    %925 = vmatprep.subr.mxu0 0.0
    %926 = vmatpush1.msra.mxu0 0.0
    %927 = vmatprep.subr.mxu0 0.0
    %928 = vmatpush1.msra.mxu0 0.0
    %929 = vmatprep.mubr.f32.mxu0 0.0
    %930 = vmatmul.mubr.f32.gmra.mrb[0].mxu0 %v863
    %v931 = vpop.f32.mrb[0].mxu0
    %v932 = vadd.f32 %v859, %v931
    %v933 = vpop.f32.mrb[0].mxu0
    %934 = vdwg.mxu0
    %vm935 = vcmask 23552
    %936 = vst.msk [vmem:[%s14] sm:$0xff] %vm935, %v932
    // Predicated region
    $region74: #{tpu_custom_call.1} parent=1 // pred_check
      _
    $region75: #{tpu_custom_call.1} parent=1 // pred_check_branch
      %938 = sbr.rel (0) target = $region77
    $region76: #{tpu_custom_call.1} parent=1 // pred_region
      _
    $region77: #{tpu_custom_call.1} parent=1 // pred_fallthru
      _
    // Predicated region
    $region78: #{tpu_custom_call.1} parent=1 // pred_check
      _
    $region79: #{tpu_custom_call.1} parent=1 // pred_check_branch
      %940 = sbr.rel (0) target = $region81
    $region80: #{tpu_custom_call.1} parent=1 // pred_region
      _
    $region81: #{tpu_custom_call.1} parent=1 // pred_fallthru
      _
    %941 = vsyncpa [#allocation3], 1
    %942 = vsyncpa [#allocation5], 1
    %943 = vsyncpa [#allocation8], 1

</llo_original>
